<compile_context>
chip_gen: v7x
topology: tpu7x:2x2x1
jax: 0.10.0
libtpu: 0.0.40
codegen_flags: <defaults>
</compile_context>

<pallas_src>
import functools

import jax
import jax.numpy as jnp
from jax.experimental import pallas as pl
from jax.experimental.pallas import tpu as pltpu

EPS = 1e-5
_TARGET_BLOCK_BYTES = 2 * 1024 * 1024     # padded bytes per x block
_MAX_LANE_TILE = 2048                     # keeps the unrolled 128-slice loop short
_VMEM_LIMIT_BYTES = 32 * 1024 * 1024
_FUSED_VMEM_BYTES = 6 * 1024 * 1024       # conservative threshold for fused path


def _round_up(n, m):
    return ((n + m - 1) // m) * m


def _sublane(itemsize):
    # Physical sublane tile height: f32 -> 8, bf16 -> 16, int8/fp8 -> 32.
    return max(8, 32 // max(1, itemsize))


def _pick_lane_tile(hw):
    """Largest multiple-of-128 divisor of HW <= _MAX_LANE_TILE (or full HW)."""
    if hw % 128 != 0:
        return hw                               # full-extent block is always legal
    units = hw // 128
    cap = max(1, _MAX_LANE_TILE // 128)
    for d in range(min(units, cap), 0, -1):
        if units % d == 0:
            return 128 * d
    return 128


def _pick_row_block(rows, tile_hw, itemsize):
    """Row block: multiple of the sublane tile dividing rows, padded bytes <= target."""
    sub = _sublane(itemsize)
    padded_lane_bytes = _round_up(tile_hw, 128) * itemsize
    cap = max(1, _TARGET_BLOCK_BYTES // (sub * padded_lane_bytes)) * sub
    cap = min(cap, rows)
    d = (cap // sub) * sub
    while d >= sub:
        if rows % d == 0:
            return d
        d -= sub
    return rows                                 # full-extent fallback (always legal)


# ---------------------------------------------------------------------------
# Stats pass (lane-aligned HW): per-row sum / sum-of-squares.
#   grid = (row_blocks, hw_tiles); width-128 partials accumulated in VMEM
#   scratch with VALU adds; one XLU lane-reduce + width-1 store per row block.
# ---------------------------------------------------------------------------
def _stats_partial_kernel(nsl, x_ref, sum_ref, sq_ref, acc_s, acc_q):
    j = pl.program_id(1)

    @pl.when(j == 0)
    def _():
        acc_s[...] = jnp.zeros_like(acc_s)
        acc_q[...] = jnp.zeros_like(acc_q)

    x = x_ref[...].astype(jnp.float32)          # (rb, tile_hw)
    s = acc_s[...]
    q = acc_q[...]
    for k in range(nsl):                        # static unroll; lane-aligned slices
        sl = x[:, k * 128:(k + 1) * 128]
        s = s + sl
        q = q + sl * sl
    acc_s[...] = s
    acc_q[...] = q

    @pl.when(j == pl.num_programs(1) - 1)
    def _():
        sum_ref[...] = jnp.sum(acc_s[...], axis=-1, keepdims=True)
        sq_ref[...] = jnp.sum(acc_q[...], axis=-1, keepdims=True)


# Stats pass (HW not a multiple of 128): single full-width lane block per row
# block, direct lane reduce (happens once per row block, so XLU cost is tiny).
def _stats_direct_kernel(x_ref, sum_ref, sq_ref):
    x = x_ref[...].astype(jnp.float32)
    sum_ref[...] = jnp.sum(x, axis=-1, keepdims=True)
    sq_ref[...] = jnp.sum(x * x, axis=-1, keepdims=True)


# ---------------------------------------------------------------------------
# Normalize pass: y = x * scale[row] + shift[row]  (rstd, gamma, beta, p[t]
# folded into one per-row scale/shift).  Fully parallel, lane-dense stores.
# ---------------------------------------------------------------------------
def _norm_kernel(x_ref, scale_ref, shift_ref, o_ref):
    x = x_ref[...].astype(jnp.float32)          # (rb, tile_hw)
    o_ref[...] = (x * scale_ref[...] + shift_ref[...]).astype(o_ref.dtype)


# ---------------------------------------------------------------------------
# Fused single-kernel path for activations that fit in VMEM: stats + normalize
# in one pass (2x HBM traffic instead of 3x, one kernel launch).
# ---------------------------------------------------------------------------
def _fused_kernel(eps, count, x_ref, prow_ref, g_ref, b_ref, o_ref):
    x = x_ref[...].astype(jnp.float32)               # (TB, C, HW)
    s = jnp.sum(x, axis=-1, keepdims=True)           # (TB, C, 1)
    q = jnp.sum(x * x, axis=-1, keepdims=True)
    s = jnp.sum(s, axis=0, keepdims=True)            # (1, C, 1)
    q = jnp.sum(q, axis=0, keepdims=True)
    inv = 1.0 / count
    mean = s * inv
    var = jnp.maximum(q * inv - mean * mean, 0.0)    # guard cancellation
    scale = jax.lax.rsqrt(var + eps) * g_ref[...]
    shift = b_ref[...] - mean * scale
    y = (x * scale + shift) * prow_ref[...]          # (TB,1,1) p per timestep row
    o_ref[...] = y.astype(o_ref.dtype)


@functools.partial(jax.jit,
                   static_argnames=("step", "eps", "fused_vmem_bytes"))
def tebn_forward(x, gamma, beta, p, *, step, eps=EPS,
                 fused_vmem_bytes=_FUSED_VMEM_BYTES):
    TB, C, H, W = x.shape
    assert TB % step == 0
    T = step
    B = TB // T
    HW = H * W
    itemsize = jnp.dtype(x.dtype).itemsize
    sub = _sublane(itemsize)

    g = gamma.astype(jnp.float32).reshape(C)
    b = beta.astype(jnp.float32).reshape(C)
    pt = p.astype(jnp.float32).reshape(T)
    count = float(TB * HW)                      # per-channel element count

    # ---- fused path for small activations -----------------------------------
    padded_io = TB * _round_up(C, sub) * _round_up(HW, 128)
    padded_f32 = TB * _round_up(C, 8) * _round_up(HW, 128)
    fused_bytes = 2 * padded_io * itemsize + 2 * padded_f32 * 4
    if fused_bytes <= fused_vmem_bytes:
        x3 = x.reshape(TB, C, HW)
        prow = jnp.repeat(pt, B).reshape(TB, 1, 1)     # p[t] per (t, b) row
        y3 = pl.pallas_call(
            functools.partial(_fused_kernel, float(eps), count),
            out_shape=jax.ShapeDtypeStruct((TB, C, HW), x.dtype),
            grid=(1,),
            in_specs=[pl.BlockSpec((TB, C, HW), lambda i: (0, 0, 0)),
                      pl.BlockSpec((TB, 1, 1), lambda i: (0, 0, 0)),
                      pl.BlockSpec((1, C, 1), lambda i: (0, 0, 0)),
                      pl.BlockSpec((1, C, 1), lambda i: (0, 0, 0))],
            out_specs=pl.BlockSpec((TB, C, HW), lambda i: (0, 0, 0)),
            compiler_params=pltpu.CompilerParams(
                vmem_limit_bytes=_VMEM_LIMIT_BYTES),
        )(x3, prow, g.reshape(1, C, 1), b.reshape(1, C, 1))
        return y3.reshape(TB, C, H, W)

    # ---- streaming two-pass path ---------------------------------------------
    rows = TB * C
    x2 = x.reshape(rows, HW)                    # free contiguous reshape, lane = HW
    tile_hw = _pick_lane_tile(HW)
    n_hw = HW // tile_hw
    rb = _pick_row_block(rows, tile_hw, itemsize)
    n_rows = rows // rb

    # pass 1: per-row sum / sum-of-squares
    if HW % 128 == 0:
        nsl = tile_hw // 128
        rowsum, rowsq = pl.pallas_call(
            functools.partial(_stats_partial_kernel, nsl),
            out_shape=(jax.ShapeDtypeStruct((rows, 1), jnp.float32),
                       jax.ShapeDtypeStruct((rows, 1), jnp.float32)),
            grid=(n_rows, n_hw),
            in_specs=[pl.BlockSpec((rb, tile_hw), lambda i, j: (i, j))],
            out_specs=(pl.BlockSpec((rb, 1), lambda i, j: (i, 0)),
                       pl.BlockSpec((rb, 1), lambda i, j: (i, 0))),
            scratch_shapes=[pltpu.VMEM((rb, 128), jnp.float32),
                            pltpu.VMEM((rb, 128), jnp.float32)],
            compiler_params=pltpu.CompilerParams(
                dimension_semantics=("parallel", "arbitrary"),
                vmem_limit_bytes=_VMEM_LIMIT_BYTES),
        )(x2)
    else:
        rowsum, rowsq = pl.pallas_call(
            _stats_direct_kernel,
            out_shape=(jax.ShapeDtypeStruct((rows, 1), jnp.float32),
                       jax.ShapeDtypeStruct((rows, 1), jnp.float32)),
            grid=(n_rows,),
            in_specs=[pl.BlockSpec((rb, HW), lambda i: (i, 0))],
            out_specs=(pl.BlockSpec((rb, 1), lambda i: (i, 0)),
                       pl.BlockSpec((rb, 1), lambda i: (i, 0))),
            compiler_params=pltpu.CompilerParams(
                dimension_semantics=("parallel",),
                vmem_limit_bytes=_VMEM_LIMIT_BYTES),
        )(x2)

    # tiny JAX epilogue: fold mean/rstd/gamma/beta/p[t] into per-row scale/shift
    total = rowsum[:, 0].reshape(TB, C).sum(axis=0)      # (C,)
    total_sq = rowsq[:, 0].reshape(TB, C).sum(axis=0)    # (C,)
    mean = total / count
    var = jnp.maximum(total_sq / count - mean * mean, 0.0)
    rstd = jax.lax.rsqrt(var + jnp.float32(eps))
    rg = rstd * g
    sh = b - mean * rg
    scale_rows = jnp.broadcast_to((pt[:, None] * rg[None, :])[:, None, :],
                                  (T, B, C)).reshape(rows, 1)
    shift_rows = jnp.broadcast_to((pt[:, None] * sh[None, :])[:, None, :],
                                  (T, B, C)).reshape(rows, 1)

    # pass 2: normalize + affine + per-timestep scale, lane-dense in and out
    y2 = pl.pallas_call(
        _norm_kernel,
        out_shape=jax.ShapeDtypeStruct((rows, HW), x.dtype),
        grid=(n_rows, n_hw),
        in_specs=[pl.BlockSpec((rb, tile_hw), lambda i, j: (i, j)),
                  pl.BlockSpec((rb, 1), lambda i, j: (i, 0)),
                  pl.BlockSpec((rb, 1), lambda i, j: (i, 0))],
        out_specs=pl.BlockSpec((rb, tile_hw), lambda i, j: (i, j)),
        compiler_params=pltpu.CompilerParams(
            dimension_semantics=("parallel", "parallel"),
            vmem_limit_bytes=_VMEM_LIMIT_BYTES),
    )(x2, scale_rows, shift_rows)

    return y2.reshape(TB, C, H, W)


# ---------------------------------------------------------------------------
# Pure-JAX reference (mirrors the PyTorch module in training mode).
# ---------------------------------------------------------------------------
def tebn_ref(x, gamma, beta, p, step, eps=EPS):
    T = step
    TB, C, H, W = x.shape
    B = TB // T
    y = x.astype(jnp.float32).reshape(T, B, C, H, W)
    mean = y.mean(axis=(0, 1, 3, 4), keepdims=True)
    var = ((y - mean) ** 2).mean(axis=(0, 1, 3, 4), keepdims=True)
    yhat = (y - mean) / jnp.sqrt(var + eps)
    yhat = yhat * gamma.reshape(1, 1, C, 1, 1) + beta.reshape(1, 1, C, 1, 1)
    yhat = yhat * p.reshape(T, 1, 1, 1, 1)
    return yhat.reshape(TB, C, H, W).astype(x.dtype)


# TODO(synk): running_mean/running_var momentum update (training side effect of
# BatchNorm3d) is not part of the forward output and is not implemented here.

if __name__ == "__main__":
    T, B, C, H, W = 4, 2, 4, 16, 16          # step must be 4: p is ones(4,1,1,1,1)
    key = jax.random.PRNGKey(0)
    x = jax.random.normal(key, (T * B, C, H, W), dtype=jnp.float32)

    # Module init is gamma=1, beta=0, p=1; use distinct deterministic values
    # to exercise the affine + per-timestep-scale code paths.
    gamma = 1.0 + 0.1 * jnp.arange(C, dtype=jnp.float32)
    beta = 0.05 * jnp.arange(C, dtype=jnp.float32)
    p = (1.0 + 0.25 * jnp.arange(T, dtype=jnp.float32)).reshape(T, 1, 1, 1, 1)

    ref = tebn_ref(x, gamma, beta, p, T)

    # Fused single-kernel path (activation fits in VMEM).
    out_fused = jax.block_until_ready(tebn_forward(x, gamma, beta, p, step=T))
    assert out_fused.shape == (T * B, C, H, W)
    assert out_fused.dtype == x.dtype
    assert jnp.allclose(out_fused, ref, rtol=1e-4, atol=1e-4), "fused mismatch"

    # Streaming two-pass path (force by disabling the fused threshold).
    out_stream = jax.block_until_ready(
        tebn_forward(x, gamma, beta, p, step=T, fused_vmem_bytes=0))
    assert jnp.allclose(out_stream, ref, rtol=1e-4, atol=1e-4), "stream mismatch"

    print("KERNEL_OK")
</pallas_src>

<mosaic_0001>
module attributes {stable_mosaic.version = 11 : i64} {
  func.func @_fused_kernel(%arg0: i32, %arg1: memref<8x4x256xf32, #tpu.memory_space<vmem>>, %arg2: memref<8x1x1xf32, #tpu.memory_space<vmem>>, %arg3: memref<1x4x1xf32, #tpu.memory_space<vmem>>, %arg4: memref<1x4x1xf32, #tpu.memory_space<vmem>>, %arg5: memref<8x4x256xf32, #tpu.memory_space<vmem>>) attributes {dimension_semantics = [#tpu.dimension_semantics<arbitrary>], iteration_bounds = array<i64: 1>, scalar_prefetch = 0 : i64, scratch_operands = 0 : i64, tpu.core_type = #tpu.core_type<tc>, window_params = [{pipeline_mode = #tpu.pipeline_mode<synchronous>, transform_indices = @transform_0, window_bounds = array<i64: 8, 4, 256>}, {pipeline_mode = #tpu.pipeline_mode<synchronous>, transform_indices = @transform_1, window_bounds = array<i64: 8, 1, 1>}, {pipeline_mode = #tpu.pipeline_mode<synchronous>, transform_indices = @transform_2, window_bounds = array<i64: 1, 4, 1>}, {pipeline_mode = #tpu.pipeline_mode<synchronous>, transform_indices = @transform_3, window_bounds = array<i64: 1, 4, 1>}, {pipeline_mode = #tpu.pipeline_mode<synchronous>, transform_indices = @transform_4, window_bounds = array<i64: 8, 4, 256>}]} {
    %c0 = arith.constant 0 : index
    %c0_0 = arith.constant 0 : index
    %c0_1 = arith.constant 0 : index
    %0 = vector.load %arg1[%c0, %c0_0, %c0_1] : memref<8x4x256xf32, #tpu.memory_space<vmem>>, vector<8x4x256xf32>
    %cst = arith.constant dense<0.000000e+00> : vector<8x4xf32>
    %1 = vector.multi_reduction <add>, %0, %cst [2] : vector<8x4x256xf32> to vector<8x4xf32>
    %2 = vector.shape_cast %1 : vector<8x4xf32> to vector<8x4x1xf32>
    %3 = arith.mulf %0, %0 : vector<8x4x256xf32>
    %cst_2 = arith.constant dense<0.000000e+00> : vector<8x4xf32>
    %4 = vector.multi_reduction <add>, %3, %cst_2 [2] : vector<8x4x256xf32> to vector<8x4xf32>
    %5 = vector.shape_cast %4 : vector<8x4xf32> to vector<8x4x1xf32>
    %cst_3 = arith.constant dense<0.000000e+00> : vector<4x1xf32>
    %6 = vector.multi_reduction <add>, %2, %cst_3 [0] : vector<8x4x1xf32> to vector<4x1xf32>
    %7 = vector.shape_cast %6 : vector<4x1xf32> to vector<1x4x1xf32>
    %cst_4 = arith.constant dense<0.000000e+00> : vector<4x1xf32>
    %8 = vector.multi_reduction <add>, %5, %cst_4 [0] : vector<8x4x1xf32> to vector<4x1xf32>
    %9 = vector.shape_cast %8 : vector<4x1xf32> to vector<1x4x1xf32>
    %cst_5 = arith.constant 4.8828125E-4 : f32
    %10 = vector.broadcast %cst_5 : f32 to vector<1x4x1xf32>
    %11 = arith.mulf %7, %10 : vector<1x4x1xf32>
    %cst_6 = arith.constant 4.8828125E-4 : f32
    %12 = vector.broadcast %cst_6 : f32 to vector<1x4x1xf32>
    %13 = arith.mulf %9, %12 : vector<1x4x1xf32>
    %14 = arith.mulf %11, %11 : vector<1x4x1xf32>
    %15 = arith.subf %13, %14 : vector<1x4x1xf32>
    %cst_7 = arith.constant 0.000000e+00 : f32
    %16 = vector.broadcast %cst_7 : f32 to vector<1x4x1xf32>
    %17 = arith.maximumf %15, %16 : vector<1x4x1xf32>
    %cst_8 = arith.constant 9.99999974E-6 : f32
    %18 = vector.broadcast %cst_8 : f32 to vector<1x4x1xf32>
    %19 = arith.addf %17, %18 : vector<1x4x1xf32>
    %20 = math.rsqrt %19 : vector<1x4x1xf32>
    %c0_9 = arith.constant 0 : index
    %c0_10 = arith.constant 0 : index
    %c0_11 = arith.constant 0 : index
    %21 = vector.load %arg3[%c0_9, %c0_10, %c0_11] : memref<1x4x1xf32, #tpu.memory_space<vmem>>, vector<1x4x1xf32>
    %22 = arith.mulf %20, %21 : vector<1x4x1xf32>
    %c0_12 = arith.constant 0 : index
    %c0_13 = arith.constant 0 : index
    %c0_14 = arith.constant 0 : index
    %23 = vector.load %arg4[%c0_12, %c0_13, %c0_14] : memref<1x4x1xf32, #tpu.memory_space<vmem>>, vector<1x4x1xf32>
    %24 = arith.mulf %11, %22 : vector<1x4x1xf32>
    %25 = arith.subf %23, %24 : vector<1x4x1xf32>
    %26 = vector.broadcast %22 : vector<1x4x1xf32> to vector<8x4x256xf32>
    %27 = arith.mulf %0, %26 : vector<8x4x256xf32>
    %28 = vector.broadcast %25 : vector<1x4x1xf32> to vector<8x4x256xf32>
    %29 = arith.addf %27, %28 : vector<8x4x256xf32>
    %c0_15 = arith.constant 0 : index
    %c0_16 = arith.constant 0 : index
    %c0_17 = arith.constant 0 : index
    %30 = vector.load %arg2[%c0_15, %c0_16, %c0_17] : memref<8x1x1xf32, #tpu.memory_space<vmem>>, vector<8x1x1xf32>
    %31 = vector.broadcast %30 : vector<8x1x1xf32> to vector<8x4x256xf32>
    %32 = arith.mulf %29, %31 : vector<8x4x256xf32>
    %c0_18 = arith.constant 0 : index
    %c0_19 = arith.constant 0 : index
    %c0_20 = arith.constant 0 : index
    %33 = vector.load %arg5[%c0_18, %c0_19, %c0_20] : memref<8x4x256xf32, #tpu.memory_space<vmem>>, vector<8x4x256xf32>
    tpu.vector_store %arg5[%c0_18, %c0_19, %c0_20], %32 {strides = array<i32>} : memref<8x4x256xf32, #tpu.memory_space<vmem>>, vector<8x4x256xf32>,
    return
  }
  func.func @transform_0(%arg0: i32) -> (i32, i32, i32) {
    %c0_i32 = arith.constant 0 : i32
    %c0_i32_0 = arith.constant 0 : i32
    %c0_i32_1 = arith.constant 0 : i32
    %c0_i32_2 = arith.constant 0 : i32
    return %c0_i32, %c0_i32_0, %c0_i32_1 : i32, i32, i32
  }
  func.func @transform_1(%arg0: i32) -> (i32, i32, i32) {
    %c0_i32 = arith.constant 0 : i32
    %c0_i32_0 = arith.constant 0 : i32
    %c0_i32_1 = arith.constant 0 : i32
    %c0_i32_2 = arith.constant 0 : i32
    return %c0_i32, %c0_i32_0, %c0_i32_1 : i32, i32, i32
  }
  func.func @transform_2(%arg0: i32) -> (i32, i32, i32) {
    %c0_i32 = arith.constant 0 : i32
    %c0_i32_0 = arith.constant 0 : i32
    %c0_i32_1 = arith.constant 0 : i32
    %c0_i32_2 = arith.constant 0 : i32
    return %c0_i32, %c0_i32_0, %c0_i32_1 : i32, i32, i32
  }
  func.func @transform_3(%arg0: i32) -> (i32, i32, i32) {
    %c0_i32 = arith.constant 0 : i32
    %c0_i32_0 = arith.constant 0 : i32
    %c0_i32_1 = arith.constant 0 : i32
    %c0_i32_2 = arith.constant 0 : i32
    return %c0_i32, %c0_i32_0, %c0_i32_1 : i32, i32, i32
  }
  func.func @transform_4(%arg0: i32) -> (i32, i32, i32) {
    %c0_i32 = arith.constant 0 : i32
    %c0_i32_0 = arith.constant 0 : i32
    %c0_i32_1 = arith.constant 0 : i32
    %c0_i32_2 = arith.constant 0 : i32
    return %c0_i32, %c0_i32_0, %c0_i32_1 : i32, i32, i32
  }
}

</mosaic_0001>

<llo_original>
// kernel: tebn_forward.1
$region0: #{tebn_forward.1}
  #allocation0 [shape = 'u32[]', space=smem, size = 0x4, offset = 0x4, fixed_abs, tag = 'smem constant byte address 0x4 - core index']
  #allocation1 [shape = 'u32[144,128]{1,0:T(1,128)}', space=vmem, size = 0x12000, scoped, tag = 'internal scratch']
  %s0 = inlined_call_operand.vmem [shape: f32[8,4,256], index: 0, kind: input, shape index: {}]
  %s1 = inlined_call_operand.vmem [shape: f32[8,1,1], index: 1, kind: input, shape index: {}]
  %s2 = inlined_call_operand.vmem [shape: f32[1,4,1], index: 2, kind: input, shape index: {}]
  %s3 = inlined_call_operand.vmem [shape: f32[1,4,1], index: 3, kind: input, shape index: {}]
  %s4 = inlined_call_operand.vmem [shape: f32[8,4,256], index: 4, kind: output, shape index: {}]
  %s5 = sld [smem:[#allocation0]]
  $region26: #{tebn_forward.1} parent=0
    _
  %s7 = ssub.s32 1, %s5
  %s8 = scalar_select 0, %s7, %s5
  // Predicated region
  $region2: #{tebn_forward.1} parent=0 // pred_check
    _
  $region3: #{tebn_forward.1} parent=0 // pred_check_branch
    %10 = sbr.rel (0) target = $region5
  $region4: #{tebn_forward.1} parent=0 // pred_region
    _
  $region5: #{tebn_forward.1} parent=0 // pred_fallthru
    _
  // Predicated region
  $region6: #{tebn_forward.1} parent=0 // pred_check
    _
  $region7: #{tebn_forward.1} parent=0 // pred_check_branch
    %12 = sbr.rel (0) target = $region9
  $region8: #{tebn_forward.1} parent=0 // pred_region
    _
  $region9: #{tebn_forward.1} parent=0 // pred_fallthru
    _
  // Predicated region
  $region10: #{tebn_forward.1} parent=0 // pred_check
    _
  $region11: #{tebn_forward.1} parent=0 // pred_check_branch
    %14 = sbr.rel (0) target = $region13
  $region12: #{tebn_forward.1} parent=0 // pred_region
    _
  $region13: #{tebn_forward.1} parent=0 // pred_fallthru
    _
  // Predicated region
  $region14: #{tebn_forward.1} parent=0 // pred_check
    _
  $region15: #{tebn_forward.1} parent=0 // pred_check_branch
    %16 = sbr.rel (0) target = $region17
  $region16: #{tebn_forward.1} parent=0 // pred_region
    _
  $region17: #{tebn_forward.1} parent=0 // pred_fallthru
    _
  %v17 = vld [vmem:[%s0] sm:$0xff]
  %v18 = vld [vmem:[%s0 + $0x8] sm:$0xff]
  %v19 = vld [vmem:[%s0 + $0x10] sm:$0xff]
  %v20 = vld [vmem:[%s0 + $0x18] sm:$0xff]
  %v21 = vld [vmem:[%s0 + $0x20] sm:$0xff]
  %v22 = vld [vmem:[%s0 + $0x28] sm:$0xff]
  %v23 = vld [vmem:[%s0 + $0x30] sm:$0xff]
  %v24 = vld [vmem:[%s0 + $0x38] sm:$0xff]
  %v33 = vcombine.high %v17, %v17
  %v34 = vcombine.high %v18, %v18
  %v35 = vcombine.high %v19, %v19
  %v36 = vcombine.high %v20, %v20
  %v37 = vcombine.high %v21, %v21
  %v38 = vcombine.high %v22, %v22
  %v39 = vcombine.high %v23, %v23
  %v40 = vcombine.high %v24, %v24
  %vm49 = vcmask 1043456
  %v50 = vsel %vm49, %v17, 0.0
  %v51 = vsel %vm49, %v33, 0.0
  %v52 = vadd.f32 %v50, %v51
  %53 = vadd.xlane.f32.xlu0 %v52
  %v54 = vpop.xlane.xlu0 %53
  %v55 = vsel %vm49, %v18, 0.0
  %v56 = vsel %vm49, %v34, 0.0
  %v57 = vadd.f32 %v55, %v56
  %58 = vadd.xlane.f32.xlu0 %v57
  %v59 = vpop.xlane.xlu0 %58
  %v60 = vsel %vm49, %v19, 0.0
  %v61 = vsel %vm49, %v35, 0.0
  %v62 = vadd.f32 %v60, %v61
  %63 = vadd.xlane.f32.xlu0 %v62
  %v64 = vpop.xlane.xlu0 %63
  %v65 = vsel %vm49, %v20, 0.0
  %v66 = vsel %vm49, %v36, 0.0
  %v67 = vadd.f32 %v65, %v66
  %68 = vadd.xlane.f32.xlu0 %v67
  %v69 = vpop.xlane.xlu0 %68
  %v70 = vsel %vm49, %v21, 0.0
  %v71 = vsel %vm49, %v37, 0.0
  %v72 = vadd.f32 %v70, %v71
  %73 = vadd.xlane.f32.xlu0 %v72
  %v74 = vpop.xlane.xlu0 %73
  %v75 = vsel %vm49, %v22, 0.0
  %v76 = vsel %vm49, %v38, 0.0
  %v77 = vadd.f32 %v75, %v76
  %78 = vadd.xlane.f32.xlu0 %v77
  %v79 = vpop.xlane.xlu0 %78
  %v80 = vsel %vm49, %v23, 0.0
  %v81 = vsel %vm49, %v39, 0.0
  %v82 = vadd.f32 %v80, %v81
  %83 = vadd.xlane.f32.xlu0 %v82
  %v84 = vpop.xlane.xlu0 %83
  %v85 = vsel %vm49, %v24, 0.0
  %v86 = vsel %vm49, %v40, 0.0
  %v87 = vadd.f32 %v85, %v86
  %88 = vadd.xlane.f32.xlu0 %v87
  %v89 = vpop.xlane.xlu0 %88
  %v90 = vmul.f32 %v17, %v17
  %v91 = vmul.f32 %v18, %v18
  %v92 = vmul.f32 %v19, %v19
  %v93 = vmul.f32 %v20, %v20
  %v94 = vmul.f32 %v21, %v21
  %v95 = vmul.f32 %v22, %v22
  %v96 = vmul.f32 %v23, %v23
  %v97 = vmul.f32 %v24, %v24
  %v106 = vcombine.high %v90, %v90
  %v107 = vcombine.high %v91, %v91
  %v108 = vcombine.high %v92, %v92
  %v109 = vcombine.high %v93, %v93
  %v110 = vcombine.high %v94, %v94
  %v111 = vcombine.high %v95, %v95
  %v112 = vcombine.high %v96, %v96
  %v113 = vcombine.high %v97, %v97
  %v122 = vsel %vm49, %v90, 0.0
  %v123 = vsel %vm49, %v106, 0.0
  %v124 = vadd.f32 %v122, %v123
  %125 = vadd.xlane.f32.xlu0 %v124
  %v126 = vpop.xlane.xlu0 %125
  %v127 = vsel %vm49, %v91, 0.0
  %v128 = vsel %vm49, %v107, 0.0
  %v129 = vadd.f32 %v127, %v128
  %130 = vadd.xlane.f32.xlu0 %v129
  %v131 = vpop.xlane.xlu0 %130
  %v132 = vsel %vm49, %v92, 0.0
  %v133 = vsel %vm49, %v108, 0.0
  %v134 = vadd.f32 %v132, %v133
  %135 = vadd.xlane.f32.xlu0 %v134
  %v136 = vpop.xlane.xlu0 %135
  %v137 = vsel %vm49, %v93, 0.0
  %v138 = vsel %vm49, %v109, 0.0
  %v139 = vadd.f32 %v137, %v138
  %140 = vadd.xlane.f32.xlu0 %v139
  %v141 = vpop.xlane.xlu0 %140
  %v142 = vsel %vm49, %v94, 0.0
  %v143 = vsel %vm49, %v110, 0.0
  %v144 = vadd.f32 %v142, %v143
  %145 = vadd.xlane.f32.xlu0 %v144
  %v146 = vpop.xlane.xlu0 %145
  %v147 = vsel %vm49, %v95, 0.0
  %v148 = vsel %vm49, %v111, 0.0
  %v149 = vadd.f32 %v147, %v148
  %150 = vadd.xlane.f32.xlu0 %v149
  %v151 = vpop.xlane.xlu0 %150
  %v152 = vsel %vm49, %v96, 0.0
  %v153 = vsel %vm49, %v112, 0.0
  %v154 = vadd.f32 %v152, %v153
  %155 = vadd.xlane.f32.xlu0 %v154
  %v156 = vpop.xlane.xlu0 %155
  %v157 = vsel %vm49, %v97, 0.0
  %v158 = vsel %vm49, %v113, 0.0
  %v159 = vadd.f32 %v157, %v158
  %160 = vadd.xlane.f32.xlu0 %v159
  %v161 = vpop.xlane.xlu0 %160
  %v162 = vsel %vm49, %v54, 0.0
  %v163 = vsel %vm49, %v59, 0.0
  %v164 = vadd.f32 %v162, %v163
  %v165 = vsel %vm49, %v64, 0.0
  %v166 = vadd.f32 %v164, %v165
  %v167 = vsel %vm49, %v69, 0.0
  %v168 = vadd.f32 %v166, %v167
  %v169 = vsel %vm49, %v74, 0.0
  %v170 = vadd.f32 %v168, %v169
  %v171 = vsel %vm49, %v79, 0.0
  %v172 = vadd.f32 %v170, %v171
  %v173 = vsel %vm49, %v84, 0.0
  %v174 = vadd.f32 %v172, %v173
  %v175 = vsel %vm49, %v89, 0.0
  %v176 = vadd.f32 %v174, %v175
  %v177 = vsel %vm49, %v126, 0.0
  %v178 = vsel %vm49, %v131, 0.0
  %v179 = vadd.f32 %v177, %v178
  %v180 = vsel %vm49, %v136, 0.0
  %v181 = vadd.f32 %v179, %v180
  %v182 = vsel %vm49, %v141, 0.0
  %v183 = vadd.f32 %v181, %v182
  %v184 = vsel %vm49, %v146, 0.0
  %v185 = vadd.f32 %v183, %v184
  %v186 = vsel %vm49, %v151, 0.0
  %v187 = vadd.f32 %v185, %v186
  %v188 = vsel %vm49, %v156, 0.0
  %v189 = vadd.f32 %v187, %v188
  %v190 = vsel %vm49, %v161, 0.0
  %v191 = vadd.f32 %v189, %v190
  %v192 = vmul.f32 %v176, 0.00048828125
  %v193 = vmul.f32 %v191, 0.00048828125
  %v194 = vmul.f32 %v192, %v192
  %v195 = vsub.f32 %v193, %v194
  %v196 = vmax.f32 %v195, 0.0
  %v197 = vadd.f32 %v196, 1e-05
  %v198 = vrsqrt.pop %v197
  %v199 = vld [vmem:[%s2] sm:$0xf]
  %v200 = vmul.f32 %v198, %v199
  %v201 = vld [vmem:[%s3] sm:$0xf]
  %v202 = vmul.f32 %v192, %v200
  %v203 = vsub.f32 %v201, %v202
  %205 = vset.pattern.permute.xlu0 0
  %206 = vperm.xlu0 %205, %v200
  %v207 = vpop.permute.xlu0 %206
  %v209 = vunpack.c.l.s4 839922192
  %v210 = vunpack.c.0.s8 %v209
  %v211 = vlaneseq
  %v212 = vshrl.u32 %v211, 7
  %v213 = vsub.s32 %v210, %v212
  %v214 = vrot.slane %v207, %v213
  %v216 = vmul.f32 %v17, %v214
  %v217 = vmul.f32 %v18, %v214
  %v218 = vmul.f32 %v19, %v214
  %v219 = vmul.f32 %v20, %v214
  %v220 = vmul.f32 %v21, %v214
  %v221 = vmul.f32 %v22, %v214
  %v222 = vmul.f32 %v23, %v214
  %v223 = vmul.f32 %v24, %v214
  %225 = vset.pattern.permute.xlu0 0
  %226 = vperm.xlu0 %225, %v203
  %v227 = vpop.permute.xlu0 %226
  %v229 = vunpack.c.l.s4 839922192
  %v230 = vunpack.c.0.s8 %v229
  %v231 = vlaneseq
  %v232 = vshrl.u32 %v231, 7
  %v233 = vsub.s32 %v230, %v232
  %v234 = vrot.slane %v227, %v233
  %v236 = vadd.f32 %v216, %v234
  %v237 = vadd.f32 %v217, %v234
  %v238 = vadd.f32 %v218, %v234
  %v239 = vadd.f32 %v219, %v234
  %v240 = vadd.f32 %v220, %v234
  %v241 = vadd.f32 %v221, %v234
  %v242 = vadd.f32 %v222, %v234
  %v243 = vadd.f32 %v223, %v234
  %v244 = vld [vmem:[%s1] sm:$0x1]
  %v245 = vld [vmem:[%s1 + $0x1] sm:$0x1]
  %v246 = vld [vmem:[%s1 + $0x2] sm:$0x1]
  %v247 = vld [vmem:[%s1 + $0x3] sm:$0x1]
  %v248 = vld [vmem:[%s1 + $0x4] sm:$0x1]
  %v249 = vld [vmem:[%s1 + $0x5] sm:$0x1]
  %v250 = vld [vmem:[%s1 + $0x6] sm:$0x1]
  %v251 = vld [vmem:[%s1 + $0x7] sm:$0x1]
  %v260 = vlaneseq
  %v261 = vshrl.u32 %v260, 7
  %v262 = vsub.s32 0, %v261
  %v263 = vrot.slane %v244, %v262
  %v264 = vlaneseq
  %v265 = vshrl.u32 %v264, 7
  %v266 = vsub.s32 0, %v265
  %v267 = vrot.slane %v245, %v266
  %v268 = vlaneseq
  %v269 = vshrl.u32 %v268, 7
  %v270 = vsub.s32 0, %v269
  %v271 = vrot.slane %v246, %v270
  %v272 = vlaneseq
  %v273 = vshrl.u32 %v272, 7
  %v274 = vsub.s32 0, %v273
  %v275 = vrot.slane %v247, %v274
  %v276 = vlaneseq
  %v277 = vshrl.u32 %v276, 7
  %v278 = vsub.s32 0, %v277
  %v279 = vrot.slane %v248, %v278
  %v280 = vlaneseq
  %v281 = vshrl.u32 %v280, 7
  %v282 = vsub.s32 0, %v281
  %v283 = vrot.slane %v249, %v282
  %v284 = vlaneseq
  %v285 = vshrl.u32 %v284, 7
  %v286 = vsub.s32 0, %v285
  %v287 = vrot.slane %v250, %v286
  %v288 = vlaneseq
  %v289 = vshrl.u32 %v288, 7
  %v290 = vsub.s32 0, %v289
  %v291 = vrot.slane %v251, %v290
  %292 = vset.pattern.permute.xlu0 0
  %293 = vperm.xlu0 %292, %v263
  %v294 = vpop.permute.xlu0 %293
  %296 = vset.pattern.permute.xlu0 0
  %297 = vperm.xlu0 %296, %v267
  %v298 = vpop.permute.xlu0 %297
  %300 = vset.pattern.permute.xlu0 0
  %301 = vperm.xlu0 %300, %v271
  %v302 = vpop.permute.xlu0 %301
  %304 = vset.pattern.permute.xlu0 0
  %305 = vperm.xlu0 %304, %v275
  %v306 = vpop.permute.xlu0 %305
  %308 = vset.pattern.permute.xlu0 0
  %309 = vperm.xlu0 %308, %v279
  %v310 = vpop.permute.xlu0 %309
  %312 = vset.pattern.permute.xlu0 0
  %313 = vperm.xlu0 %312, %v283
  %v314 = vpop.permute.xlu0 %313
  %316 = vset.pattern.permute.xlu0 0
  %317 = vperm.xlu0 %316, %v287
  %v318 = vpop.permute.xlu0 %317
  %320 = vset.pattern.permute.xlu0 0
  %321 = vperm.xlu0 %320, %v291
  %v322 = vpop.permute.xlu0 %321
  %v324 = vmul.f32 %v236, %v294
  %v325 = vmul.f32 %v237, %v298
  %v326 = vmul.f32 %v238, %v302
  %v327 = vmul.f32 %v239, %v306
  %v328 = vmul.f32 %v240, %v310
  %v329 = vmul.f32 %v241, %v314
  %v330 = vmul.f32 %v242, %v318
  %v331 = vmul.f32 %v243, %v322
  %332 = vst [vmem:[%s4] sm:$0xff] %v324
  %333 = vst [vmem:[%s4 + $0x8] sm:$0xff] %v325
  %334 = vst [vmem:[%s4 + $0x10] sm:$0xff] %v326
  %335 = vst [vmem:[%s4 + $0x18] sm:$0xff] %v327
  %336 = vst [vmem:[%s4 + $0x20] sm:$0xff] %v328
  %337 = vst [vmem:[%s4 + $0x28] sm:$0xff] %v329
  %338 = vst [vmem:[%s4 + $0x30] sm:$0xff] %v330
  %339 = vst [vmem:[%s4 + $0x38] sm:$0xff] %v331
  // Predicated region
  $region18: #{tebn_forward.1} parent=0 // pred_check
    _
  $region19: #{tebn_forward.1} parent=0 // pred_check_branch
    %341 = sbr.rel (0) target = $region21
  $region20: #{tebn_forward.1} parent=0 // pred_region
    _
  $region21: #{tebn_forward.1} parent=0 // pred_fallthru
    _
  // Predicated region
  $region22: #{tebn_forward.1} parent=0 // pred_check
    _
  $region23: #{tebn_forward.1} parent=0 // pred_check_branch
    %343 = sbr.rel (0) target = $region25
  $region24: #{tebn_forward.1} parent=0 // pred_region
    _
  $region25: #{tebn_forward.1} parent=0 // pred_fallthru
    _

</llo_original>
